<compile_context>
chip_gen: v7x
topology: tpu7x:2x2x1
jax: 0.10.0
libtpu: 0.0.40
codegen_flags: <defaults>
</compile_context>

<pallas_src>
import functools

import jax
import jax.numpy as jnp
from jax.experimental import pallas as pl
from jax.experimental.pallas import tpu as pltpu


def _round_up(n: int, k: int) -> int:
    return (n + k - 1) // k * k


def _cdiv(a: int, b: int) -> int:
    return (a + b - 1) // b


def _choose_block(n: int, candidates, min_blocks: int = 1) -> int:
    """Largest candidate dividing n with at least `min_blocks` blocks; relaxed fallbacks."""
    for c in candidates:
        if n % c == 0 and n // c >= min_blocks:
            return c
    for c in candidates:
        if n % c == 0:
            return c
    return n  # block == full dim is always legal


# --------------------------------------------------------------------------------------------
# Kernel
# --------------------------------------------------------------------------------------------
def _int8_linear_kernel(x_ref, w_ref, s_ref, o_ref, acc_ref, *, k_chunk):
    """One (tm, tn) output tile, accumulated over the K grid axis.

    x_ref  : [tm, tk]   activation dtype (bf16/f32)
    w_ref  : [tk, tn]   int8, K-major (lane-dense in N)
    s_ref  : [1,  tn]   f32 per-output-channel scales
    o_ref  : [tm, tn]   output dtype
    acc_ref: [tm, tn]   f32 VMEM accumulator scratch
    """
    k = pl.program_id(2)

    @pl.when(k == 0)
    def _init():
        acc_ref[...] = jnp.zeros_like(acc_ref)

    tk = w_ref.shape[0]
    acc = acc_ref[...]
    # Chunk the int8 -> compute-dtype cast (matches weight.to(input.dtype)) over 512-deep
    # K sub-slabs: keeps the materialized bf16 copy small under v7x's 64 MiB VMEM while
    # still feeding the MXU full-depth pushes.  Static slices -> zero runtime cost.
    for lo in range(0, tk, k_chunk):
        w = w_ref[pl.ds(lo, k_chunk), :].astype(x_ref.dtype)
        acc = acc + jnp.dot(x_ref[:, pl.ds(lo, k_chunk)], w,
                            preferred_element_type=jnp.float32)
    acc_ref[...] = acc

    @pl.when(k == pl.num_programs(2) - 1)
    def _finalize():
        # Per-output-channel scale applied once, on the f32 accumulator.
        o_ref[...] = (acc * s_ref[...]).astype(o_ref.dtype)


# --------------------------------------------------------------------------------------------
# One-time weight preparation (load-time, NOT the hot path)
# --------------------------------------------------------------------------------------------
def prepare_int8_weight(weight, scales, *, n_align: int = 256, k_align: int = 512):
    """Transpose the module's [N, K] int8 weight to K-major [K, N] and zero-pad N and K to the
    tile alignments the kernel will pick (N -> x256 lane-dense, K -> x512 contraction depth).
    Padded output columns get zero weight AND zero scale, so they contribute nothing and are
    sliced off after the kernel."""
    N, K = weight.shape
    Np = _round_up(N, n_align)
    Kp = _round_up(K, k_align)
    w_kn = jnp.zeros((Kp, Np), jnp.int8).at[:K, :N].set(weight.T)
    s_p = jnp.zeros((1, Np), jnp.float32).at[0, :N].set(scales.astype(jnp.float32))
    return w_kn, s_p


# --------------------------------------------------------------------------------------------
# Tile plan
# --------------------------------------------------------------------------------------------
def _pick_tiles(M: int, Np: int, Kp: int):
    if M <= 128:
        # Decode / tiny batch: HBM-bound on the weight stream.  Target ~1-2 MiB int8 weight
        # tiles per grid step (tn up to 1024, tk up to 2048) so per-step overhead is amortized,
        # but keep >= 2 j-blocks when N allows so both v7x TensorCores get parallel work.
        tm = _round_up(max(M, 1), 16)
        tn = _choose_block(Np, (1024, 512, 256, 128), min_blocks=2)
        tk = _choose_block(Kp, (2048, 1024, 512, 256, 128))
    else:
        # Prefill: MXU-bound.  tm up to 512 (balanced across i-blocks to avoid a ragged last
        # block) halves weight re-fetch vs tm=256; tn=256 fills the 256-wide MXU output.
        n_m_blocks = _cdiv(M, 512)
        tm = _round_up(_cdiv(M, n_m_blocks), 16)
        tn = _choose_block(Np, (256, 128))
        tk = _choose_block(Kp, (1024, 512, 256, 128))
    return tm, tn, tk


# --------------------------------------------------------------------------------------------
# Hot path
# --------------------------------------------------------------------------------------------
@functools.partial(jax.jit, static_argnames=("out_features",))
def _int8_linear_prepared(x, w_kn, scales_p, *, out_features):
    """out = (x @ dequant(W)^T) * scales with a prepared (K-major, padded) weight."""
    lead = x.shape[:-1]
    K = x.shape[-1]
    Kp, Np = w_kn.shape
    x2 = x.reshape(-1, K)
    M = x2.shape[0]

    tm, tn, tk = _pick_tiles(M, Np, Kp)
    k_chunk = min(512, tk)
    Mp = _round_up(M, tm)

    # Skip the (full read+write) activation pad when already tile-aligned.
    if Mp == M and Kp == K:
        x2p = x2
    else:
        x2p = jnp.pad(x2, ((0, Mp - M), (0, Kp - K)))

    # F.linear(x, weight.to(x.dtype)) * bf16_scales
    out_dtype = jnp.result_type(x.dtype, jnp.bfloat16)
    x_item = jnp.dtype(x.dtype).itemsize
    o_item = jnp.dtype(out_dtype).itemsize

    # Explicit VMEM budget for the chosen tiles (double buffers + cast chunk + accumulator),
    # clamped to [32 MiB, 48 MiB]: above v5e's 16 MiB scoped default, inside v7x's 64 MiB.
    est = (2 * tm * tk * x_item          # double-buffered activation tiles
           + 2 * tk * tn                 # double-buffered int8 weight tiles
           + 2 * k_chunk * tn * x_item   # materialized cast chunk (+ scheduling headroom)
           + tm * tn * 4                 # f32 accumulator scratch
           + 2 * tm * tn * o_item        # double-buffered output tiles
           + 2 * tn * 4)                 # scales
    vmem_limit = int(min(max(2 * est + (8 << 20), 32 << 20), 48 << 20))

    grid = (Mp // tm, Np // tn, Kp // tk)
    out = pl.pallas_call(
        functools.partial(_int8_linear_kernel, k_chunk=k_chunk),
        out_shape=jax.ShapeDtypeStruct((Mp, Np), out_dtype),
        grid=grid,
        in_specs=[
            pl.BlockSpec((tm, tk), lambda i, j, k: (i, k)),   # activations
            pl.BlockSpec((tk, tn), lambda i, j, k: (k, j)),   # K-major int8 weight
            pl.BlockSpec((1, tn), lambda i, j, k: (0, j)),    # per-channel scales
        ],
        out_specs=pl.BlockSpec((tm, tn), lambda i, j, k: (i, j)),
        scratch_shapes=[pltpu.VMEM((tm, tn), jnp.float32)],
        compiler_params=pltpu.CompilerParams(
            dimension_semantics=("parallel", "parallel", "arbitrary"),
            vmem_limit_bytes=vmem_limit),
    )(x2p, w_kn, scales_p)

    out = out[:M, :out_features]
    return out.reshape(lead + (out_features,))


class WeightOnlyInt8Linear:
    """Weight-only int8 linear.  The weight transpose/pad runs ONCE here (load time); every
    forward call hits only the Pallas matmul kernel."""

    def __init__(self, weight, scales):
        self.out_features = int(weight.shape[0])
        self.in_features = int(weight.shape[1])
        w_kn, s_p = prepare_int8_weight(weight, scales)
        self.w_kn = jax.block_until_ready(w_kn)
        self.s_p = jax.block_until_ready(s_p)

    def __call__(self, x):
        # NOTE: float32 activations are functionally correct (matches weight.to(x.dtype)) but
        # run the MXU at a fraction of bf16 throughput — prefer bf16 inputs.
        return _int8_linear_prepared(x, self.w_kn, self.s_p, out_features=self.out_features)


def weight_only_int8_linear(x, weight, scales):
    """Convenience one-shot API (re-preps the weight per call — prefer WeightOnlyInt8Linear)."""
    w_kn, s_p = prepare_int8_weight(weight, scales)
    return _int8_linear_prepared(x, w_kn, s_p, out_features=weight.shape[0])


if __name__ == "__main__":
    key = jax.random.PRNGKey(0)
    k_w, k_s, k_x1, k_x2 = jax.random.split(key, 4)

    in_features, out_features = 384, 96  # exercises N padding (96 -> 256) and K padding (384 -> 512)

    weight = jax.random.randint(
        k_w, (out_features, in_features), -128, 128, dtype=jnp.int32).astype(jnp.int8)
    scales = (jax.random.uniform(k_s, (out_features,), jnp.float32) * 0.02
              + 0.001).astype(jnp.bfloat16)

    layer = WeightOnlyInt8Linear(weight, scales)  # one-time prep happens here

    def reference(x):
        r = jnp.einsum("...k,nk->...n", x.astype(jnp.float32), weight.astype(jnp.float32))
        return r * scales.astype(jnp.float32)

    # (a) decode-shaped call (small M -> large-weight-tile path)
    x_dec = jax.random.normal(k_x1, (2, 8, in_features), jnp.float32).astype(jnp.bfloat16)
    out_dec = jax.block_until_ready(layer(x_dec))
    assert out_dec.shape == (2, 8, out_features), out_dec.shape
    assert out_dec.dtype == jnp.bfloat16, out_dec.dtype

    # (b) prefill-shaped call (M = 256 -> large-tm path)
    x_pre = jax.random.normal(k_x2, (2, 128, in_features), jnp.float32).astype(jnp.bfloat16)
    out_pre = jax.block_until_ready(layer(x_pre))
    assert out_pre.shape == (2, 128, out_features), out_pre.shape
    assert out_pre.dtype == jnp.bfloat16, out_pre.dtype

    for out, x in ((out_dec, x_dec), (out_pre, x_pre)):
        ref = reference(x)
        err = float(jnp.max(jnp.abs(out.astype(jnp.float32) - ref)))
        denom = float(jnp.max(jnp.abs(ref))) + 1e-6
        assert err / denom < 2e-2, (err, denom)

    print("KERNEL_OK")
</pallas_src>

<mosaic_0001>
module attributes {stable_mosaic.version = 11 : i64} {
  func.func @_int8_linear_kernel(%arg0: i32, %arg1: i32, %arg2: i32, %arg3: memref<16x512xbf16, #tpu.memory_space<vmem>>, %arg4: memref<512x128xi8, #tpu.memory_space<vmem>>, %arg5: memref<1x128xf32, #tpu.memory_space<vmem>>, %arg6: memref<16x128xbf16, #tpu.memory_space<vmem>>, %arg7: memref<16x128xf32, #tpu.memory_space<vmem>>) attributes {dimension_semantics = [#tpu.dimension_semantics<parallel>, #tpu.dimension_semantics<parallel>, #tpu.dimension_semantics<arbitrary>], iteration_bounds = array<i64: 1, 2, 1>, scalar_prefetch = 0 : i64, scratch_operands = 1 : i64, tpu.core_type = #tpu.core_type<tc>, window_params = [{transform_indices = @transform_0, window_bounds = array<i64: 16, 512>}, {transform_indices = @transform_1, window_bounds = array<i64: 512, 128>}, {transform_indices = @transform_2, window_bounds = array<i64: 1, 128>}, {transform_indices = @transform_3, window_bounds = array<i64: 16, 128>}]} {
    %c0_i32 = arith.constant 0 : i32
    %0 = arith.cmpi eq, %arg2, %c0_i32 : i32
    %1 = arith.extui %0 : i1 to i32
    %c0_i32_0 = arith.constant 0 : i32
    %2 = arith.cmpi ne, %1, %c0_i32_0 : i32
    scf.if %2 {
      %cst_10 = arith.constant 0.000000e+00 : f32
      %13 = vector.broadcast %cst_10 : f32 to vector<16x128xf32>
      %c0_11 = arith.constant 0 : index
      %c0_12 = arith.constant 0 : index
      %14 = vector.load %arg7[%c0_11, %c0_12] : memref<16x128xf32, #tpu.memory_space<vmem>>, vector<16x128xf32>
      tpu.vector_store %arg7[%c0_11, %c0_12], %13 {strides = array<i32>} : memref<16x128xf32, #tpu.memory_space<vmem>>, vector<16x128xf32>,
    } else {
    }
    %c0 = arith.constant 0 : index
    %c0_1 = arith.constant 0 : index
    %3 = vector.load %arg7[%c0, %c0_1] : memref<16x128xf32, #tpu.memory_space<vmem>>, vector<16x128xf32>
    %c0_2 = arith.constant 0 : index
    %c0_3 = arith.constant 0 : index
    %4 = vector.load %arg4[%c0_2, %c0_3] : memref<512x128xi8, #tpu.memory_space<vmem>>, vector<512x128xi8>
    %5 = arith.sitofp %4 : vector<512x128xi8> to vector<512x128xbf16>
    %c0_4 = arith.constant 0 : index
    %c0_5 = arith.constant 0 : index
    %6 = vector.load %arg3[%c0_4, %c0_5] : memref<16x512xbf16, #tpu.memory_space<vmem>>, vector<16x512xbf16>
    %cst = arith.constant dense<0.000000e+00> : vector<16x128xf32>
    %7 = tpu.matmul %6, %5, %cst {dimension_numbers = #tpu.dot_dimension_numbers<[1], [0], [0], [1], [0, 0, 1, 1], [], []>} : vector<16x512xbf16>, vector<512x128xbf16>, vector<16x128xf32> -> vector<16x128xf32>
    %8 = arith.addf %3, %7 : vector<16x128xf32>
    %c0_6 = arith.constant 0 : index
    %c0_7 = arith.constant 0 : index
    %9 = vector.load %arg7[%c0_6, %c0_7] : memref<16x128xf32, #tpu.memory_space<vmem>>, vector<16x128xf32>
    tpu.vector_store %arg7[%c0_6, %c0_7], %8 {strides = array<i32>} : memref<16x128xf32, #tpu.memory_space<vmem>>, vector<16x128xf32>,
    %c0_i32_8 = arith.constant 0 : i32
    %10 = arith.cmpi eq, %arg2, %c0_i32_8 : i32
    %11 = arith.extui %10 : i1 to i32
    %c0_i32_9 = arith.constant 0 : i32
    %12 = arith.cmpi ne, %11, %c0_i32_9 : i32
    scf.if %12 {
      %c0_10 = arith.constant 0 : index
      %c0_11 = arith.constant 0 : index
      %13 = vector.load %arg5[%c0_10, %c0_11] : memref<1x128xf32, #tpu.memory_space<vmem>>, vector<1x128xf32>
      %14 = vector.broadcast %13 : vector<1x128xf32> to vector<16x128xf32>
      %15 = arith.mulf %8, %14 : vector<16x128xf32>
      %16 = arith.truncf %15 : vector<16x128xf32> to vector<16x128xbf16>
      %c0_12 = arith.constant 0 : index
      %c0_13 = arith.constant 0 : index
      %17 = vector.load %arg6[%c0_12, %c0_13] : memref<16x128xbf16, #tpu.memory_space<vmem>>, vector<16x128xbf16>
      tpu.vector_store %arg6[%c0_12, %c0_13], %16 {strides = array<i32>} : memref<16x128xbf16, #tpu.memory_space<vmem>>, vector<16x128xbf16>,
    } else {
    }
    return
  }
  func.func @transform_0(%arg0: i32, %arg1: i32, %arg2: i32) -> (i32, i32) {
    %c0_i32 = arith.constant 0 : i32
    return %arg0, %arg2 : i32, i32
  }
  func.func @transform_1(%arg0: i32, %arg1: i32, %arg2: i32) -> (i32, i32) {
    %c0_i32 = arith.constant 0 : i32
    return %arg2, %arg1 : i32, i32
  }
  func.func @transform_2(%arg0: i32, %arg1: i32, %arg2: i32) -> (i32, i32) {
    %c0_i32 = arith.constant 0 : i32
    %c0_i32_0 = arith.constant 0 : i32
    return %c0_i32, %arg1 : i32, i32
  }
  func.func @transform_3(%arg0: i32, %arg1: i32, %arg2: i32) -> (i32, i32) {
    %c0_i32 = arith.constant 0 : i32
    return %arg0, %arg1 : i32, i32
  }
}

</mosaic_0001>

<llo_original>
// kernel: _int8_linear_prepared.1
$region0: #{_int8_linear_prepared.1}
  #allocation0 [shape = 'u32[]', space=smem, size = 0x4, offset = 0x4, fixed_abs, tag = 'smem constant byte address 0x4 - core index']
  #allocation1 [shape = 'u32[144,128]{1,0:T(1,128)}', space=vmem, size = 0x12000, scoped, tag = 'internal scratch']
  #allocation2 [shape = 'f32[16,128]{1,0:T(8,128)}', space=vmem, size = 0x2000, scoped, tag = 'scratch operand']
  %s0 = inlined_call_operand.vmem [shape: bf16[16,512], index: 0, kind: input, shape index: {}]
  %s1 = inlined_call_operand.hbm [shape: s8[512,256], index: 1, kind: input, shape index: {}]
  %s2 = inlined_call_operand.vmem [shape: f32[1,256], index: 2, kind: input, shape index: {}]
  %s3 = inlined_call_operand.vmem [shape: bf16[16,256], index: 3, kind: output, shape index: {}]
  %s4 = sld [smem:[#allocation0]]
  $region94: #{_int8_linear_prepared.1} parent=0
    _
  %s6 = ssub.s32 1, %s4
  %s7 = scalar_select 0, %s6, %s4
  $region1: #{_int8_linear_prepared.1} parent=0
    #allocation3 [shape = 'u8[131072]{0}', space=vmem, size = 0x20000, scoped, tag = 'input window, operand 1']
    #allocation4 [shape = 's32[2]{0}', space=sflag, size = 0x8, scoped, tag = 'scoped memory for _int8_linear_prepared.1']
    #allocation5 [shape = 'u8[8192]{0}', space=vmem, size = 0x2000, scoped, tag = 'output window, operand 0']
    %8 = vsyncpa [#allocation4], 0
    %s9 = scalar_lea.sflag [#allocation4], 1
    %10 = vsyncpa %s9, 0
    loop: start=0, step=1, limit=4
    $region2: #{_int8_linear_prepared.1} parent=1 // loop_pre_header
      _
    $region3: #{_int8_linear_prepared.1} parent=1 // loop_header
      %s12 = sphi 0, %s16
      %p13 = scmp.ge.s32.totalorder %s12, 4
      %s19 = sphi 0, %s38
      %s20 = sphi 0, %s34
      %s21 = sphi 0, %s30
      %s22 = sphi 0, %s19
      %s23 = sphi 0, %s20
      %s24 = sphi 0, %s21
      %s25 = sphi 0, %s22
      %s26 = sphi 0, %s23
      %s27 = sphi 0, %s24
      %s43 = sphi 0, %s45
      %s46 = sphi 0, %s43
      %s47 = sphi 0, %s46
      %s63 = sphi 0, %s47
      %s71 = sphi 0, %s73
      %s74 = sphi 0, %s71
      %s75 = sphi 0, %s74
      %s91 = sphi 0, %s75
      %s97 = sphi 0, %s99
      %s100 = sphi 0, %s97
      %s101 = sphi 0, %s100
      %s117 = sphi 0, %s101
      %s125 = sphi 0, %s127
      %s128 = sphi 0, %s125
      %s129 = sphi 0, %s128
      %s145 = sphi 0, %s129
    $region4: #{_int8_linear_prepared.1} parent=1 // loop_header_branch
      %15 = sbr.rel (%p13) target = $region8
    $region5: #{_int8_linear_prepared.1} parent=1 // loop_body
      %s17 = ssub.s32 %s12, 1
      %s18 = ssub.s32 %s12, 2
      %s28 = sadd.s32 1, %s21
      %p29 = scmp.ge.s32.totalorder %s28, 1
      %s30 = scalar_select %p29, 0, %s28
      %s31 = sadd.s32 1, %s20
      %s32 = scalar_select %p29, %s31, %s20
      %p33 = scmp.ge.s32.totalorder %s32, 2
      %s34 = scalar_select %p33, 0, %s32
      %s35 = sadd.s32 1, %s19
      %s36 = scalar_select %p33, %s35, %s19
      %p37 = scmp.ge.s32.totalorder %s36, 1
      %s38 = scalar_select %p37, 0, %s36
      %s39 = ssub.s32 %s19, %s38
      %s40 = ssub.s32 %s21, %s30
      %s41 = sor.u32 %s39, %s40
      %p42 = scmp.eq.s32.totalorder %s41, 0
      %s44 = sadd.s32 %s43, 1
      %s45 = scalar_select %p42, %s43, %s44
      %p48 = pneg %p42
      %p49 = scmp.eq.s32.totalorder %s12, 1
      %p50 = por %p48, %p49
      %p51 = scmp.ne.s32.totalorder %s43, %s46
      %p52 = scmp.eq.s32.totalorder %s12, 0
      %p53 = por %p51, %p52
      %p54 = scmp.ne.s32.totalorder %s43, %s46
      %p55 = scmp.eq.s32.totalorder %s17, 1
      %p56 = por %p54, %p55
      %p57 = scmp.ne.s32.totalorder %s46, %s47
      %p58 = scmp.eq.s32.totalorder %s17, 0
      %p59 = por %p57, %p58
      %p60 = scmp.ne.s32.totalorder %s46, %s47
      %p61 = scmp.eq.s32.totalorder %s18, 1
      %p62 = por %p60, %p61
      %p64 = scmp.ne.s32.totalorder %s47, %s63
      %p65 = scmp.eq.s32.totalorder %s18, 0
      %p66 = por %p64, %p65
      %s67 = ssub.s32 %s21, %s30
      %s68 = ssub.s32 %s20, %s34
      %s69 = sor.u32 %s67, %s68
      %p70 = scmp.eq.s32.totalorder %s69, 0
      %s72 = sadd.s32 %s71, 1
      %s73 = scalar_select %p70, %s71, %s72
      %p76 = pneg %p70
      %p77 = scmp.eq.s32.totalorder %s12, 1
      %p78 = por %p76, %p77
      %p79 = scmp.ne.s32.totalorder %s71, %s74
      %p80 = scmp.eq.s32.totalorder %s12, 0
      %p81 = por %p79, %p80
      %p82 = scmp.ne.s32.totalorder %s71, %s74
      %p83 = scmp.eq.s32.totalorder %s17, 1
      %p84 = por %p82, %p83
      %p85 = scmp.ne.s32.totalorder %s74, %s75
      %p86 = scmp.eq.s32.totalorder %s17, 0
      %p87 = por %p85, %p86
      %p88 = scmp.ne.s32.totalorder %s74, %s75
      %p89 = scmp.eq.s32.totalorder %s18, 1
      %p90 = por %p88, %p89
      %p92 = scmp.ne.s32.totalorder %s75, %s91
      %p93 = scmp.eq.s32.totalorder %s18, 0
      %p94 = por %p92, %p93
      %s95 = ssub.s32 %s20, %s34
      %p96 = scmp.eq.s32.totalorder %s95, 0
      %s98 = sadd.s32 %s97, 1
      %s99 = scalar_select %p96, %s97, %s98
      %p102 = pneg %p96
      %p103 = scmp.eq.s32.totalorder %s12, 1
      %p104 = por %p102, %p103
      %p105 = scmp.ne.s32.totalorder %s97, %s100
      %p106 = scmp.eq.s32.totalorder %s12, 0
      %p107 = por %p105, %p106
      %p108 = scmp.ne.s32.totalorder %s97, %s100
      %p109 = scmp.eq.s32.totalorder %s17, 1
      %p110 = por %p108, %p109
      %p111 = scmp.ne.s32.totalorder %s100, %s101
      %p112 = scmp.eq.s32.totalorder %s17, 0
      %p113 = por %p111, %p112
      %p114 = scmp.ne.s32.totalorder %s100, %s101
      %p115 = scmp.eq.s32.totalorder %s18, 1
      %p116 = por %p114, %p115
      %p118 = scmp.ne.s32.totalorder %s101, %s117
      %p119 = scmp.eq.s32.totalorder %s18, 0
      %p120 = por %p118, %p119
      %s121 = ssub.s32 %s19, %s38
      %s122 = ssub.s32 %s20, %s34
      %s123 = sor.u32 %s121, %s122
      %p124 = scmp.eq.s32.totalorder %s123, 0
      %s126 = sadd.s32 %s125, 1
      %s127 = scalar_select %p124, %s125, %s126
      %p130 = pneg %p124
      %p131 = scmp.eq.s32.totalorder %s12, 1
      %p132 = por %p130, %p131
      %p133 = scmp.ne.s32.totalorder %s125, %s128
      %p134 = scmp.eq.s32.totalorder %s12, 0
      %p135 = por %p133, %p134
      %p136 = scmp.ne.s32.totalorder %s125, %s128
      %p137 = scmp.eq.s32.totalorder %s17, 1
      %p138 = por %p136, %p137
      %p139 = scmp.ne.s32.totalorder %s128, %s129
      %p140 = scmp.eq.s32.totalorder %s17, 0
      %p141 = por %p139, %p140
      %p142 = scmp.ne.s32.totalorder %s128, %s129
      %p143 = scmp.eq.s32.totalorder %s18, 1
      %p144 = por %p142, %p143
      %p146 = scmp.ne.s32.totalorder %s129, %s145
      %p147 = scmp.eq.s32.totalorder %s18, 0
      %p148 = por %p146, %p147
      %p149 = scmp.le.s32.totalorder 1, %s12
      %p150 = scmp.lt.s32.totalorder %s12, 3
      %p151 = pnand %p149, %p150
      %p152 = pneg %p151
      // Predicated region
      $region9: #{_int8_linear_prepared.1} parent=5 // pred_check
        _
      $region10: #{_int8_linear_prepared.1} parent=5 // pred_check_branch
        %154 = sbr.rel (%p151) target = $region12
      $region11: #{_int8_linear_prepared.1} parent=5 // pred_region
        %s155 = ssub.s32 %s12, 1
        // Predicated region
        $region13: #{_int8_linear_prepared.1} parent=11 // pred_check
          %p156 = pneg %p59
        $region14: #{_int8_linear_prepared.1} parent=11 // pred_check_branch
          %158 = sbr.rel (%p156) target = $region16
        $region15: #{_int8_linear_prepared.1} parent=11 // pred_region
          %s159 = smul.u32 2, %s22
          %s160 = smul.u32 4, %s24
          %p161 = scmp.lt.s32.totalorder %s159, 1
          %s162 = scalar_select %p161, %s159, 1
          %p163 = scmp.lt.s32.totalorder %s160, 3
          %s164 = scalar_select %p163, %s160, 3
          %s165 = smul.addr %s162, 4
          %s166 = sadd.s32 %s164, %s165
          %s167 = smul.addr %s166, 4
          %s168 = scalar_lea.vmem %s0, %s167
          %s169 = smul.u32 2, %s22
          %s170 = smul.u32 4, %s24
        $region16: #{_int8_linear_prepared.1} parent=11 // pred_fallthru
          _
      $region12: #{_int8_linear_prepared.1} parent=5 // pred_fallthru
        _
      %p171 = scmp.lt.s32.totalorder %s12, 2
      // Predicated region
      $region17: #{_int8_linear_prepared.1} parent=5 // pred_check
        %p172 = pneg %p171
      $region18: #{_int8_linear_prepared.1} parent=5 // pred_check_branch
        %174 = sbr.rel (%p172) target = $region20
      $region19: #{_int8_linear_prepared.1} parent=5 // pred_region
        // Predicated region
        $region21: #{_int8_linear_prepared.1} parent=19 // pred_check
          %p175 = pneg %p81
        $region22: #{_int8_linear_prepared.1} parent=19 // pred_check_branch
          %177 = sbr.rel (%p175) target = $region24
        $region23: #{_int8_linear_prepared.1} parent=19 // pred_region
          %s178 = sand.u32 %s71, 1
          %s179 = scalar_lea.sflag [#allocation4], %s178
          %s180 = sand.u32 %s71, 1
          %s181 = smul.addr %s180, 128
          %s182 = scalar_lea.vmem [#allocation3], %s181
          %s183 = smul.u32 16, %s21
          %s185 = ssub.s32 2048, 2048
          %186 = vsyncadd %s179, %s185
          %s187 = smul.addr %s183, 2
          %s188 = sadd.s32 %s20, %s187
          %s189 = smul.addr %s188, 128
          %s190 = scalar_lea.hbm %s1, %s189
          %s191 = sshll.u32 %s182, 4
          %s192 = int_to_ptr.vmem [resolvable:$true] %s191
          %197 = dma.hbm_to_vmem [thread:$0]  %s190, 2048, %s192, %s179, 256, 128, 8
        $region24: #{_int8_linear_prepared.1} parent=19 // pred_fallthru
          _
        // Predicated region
        $region25: #{_int8_linear_prepared.1} parent=19 // pred_check
          %p198 = pneg %p107
        $region26: #{_int8_linear_prepared.1} parent=19 // pred_check_branch
          %200 = sbr.rel (%p198) target = $region28
        $region27: #{_int8_linear_prepared.1} parent=19 // pred_region
          %p201 = scmp.lt.s32.totalorder %s20, 1
          %s202 = scalar_select %p201, %s20, 1
          %s203 = scalar_lea.vmem %s2, %s202
        $region28: #{_int8_linear_prepared.1} parent=19 // pred_fallthru
          _
      $region20: #{_int8_linear_prepared.1} parent=5 // pred_fallthru
        _
      %p204 = scmp.le.s32.totalorder 1, %s12
      %p205 = scmp.lt.s32.totalorder %s12, 3
      %p206 = pnand %p204, %p205
      %p207 = pneg %p206
      // Predicated region
      $region29: #{_int8_linear_prepared.1} parent=5 // pred_check
        _
      $region30: #{_int8_linear_prepared.1} parent=5 // pred_check_branch
        %209 = sbr.rel (%p206) target = $region32
      $region31: #{_int8_linear_prepared.1} parent=5 // pred_region
        %s210 = ssub.s32 %s12, 1
        %s211 = sand.u32 %s74, 1
        %s212 = scalar_lea.sflag [#allocation4], %s211
        %s213 = sand.u32 %s74, 1
        %s214 = smul.addr %s213, 128
        %s215 = scalar_lea.vmem [#allocation3], %s214
        // Predicated region
        $region33: #{_int8_linear_prepared.1} parent=31 // pred_check
          %p216 = pneg %p87
        $region34: #{_int8_linear_prepared.1} parent=31 // pred_check_branch
          %218 = sbr.rel (%p216) target = $region36
        $region35: #{_int8_linear_prepared.1} parent=31 // pred_region
          %219 = dma.done %s212, 2048
        $region36: #{_int8_linear_prepared.1} parent=31 // pred_fallthru
          _
        %s220 = smul.u32 2, %s22
        %s221 = smul.u32 4, %s24
        %p222 = scmp.lt.s32.totalorder %s220, 1
        %s223 = scalar_select %p222, %s220, 1
        %p224 = scmp.lt.s32.totalorder %s221, 3
        %s225 = scalar_select %p224, %s221, 3
        %s226 = smul.addr %s223, 4
        %s227 = sadd.s32 %s225, %s226
        %s228 = smul.addr %s227, 4
        %s229 = scalar_lea.vmem %s0, %s228
        %p230 = pneg %p59
        %p231 = pneg %p56
        %s232 = sand.u32 %s74, 1
        %s233 = scalar_lea.sflag [#allocation4], %s232
        %s234 = sand.u32 %s74, 1
        %s235 = smul.addr %s234, 128
        %s236 = scalar_lea.vmem [#allocation3], %s235
        %p237 = pneg %p87
        %p238 = pneg %p84
        %p239 = scmp.lt.s32.totalorder %s23, 1
        %s240 = scalar_select %p239, %s23, 1
        %s241 = scalar_lea.vmem %s2, %s240
        %p242 = pneg %p113
        %p243 = pneg %p110
        %p244 = pneg %p141
        %p245 = pneg %p138
        %s246 = sand.u32 %s128, 1
        %s247 = sand.u32 %s128, 1
        %s248 = smul.addr %s247, 8
        %s249 = scalar_lea.vmem [#allocation5], %s248
        %s250 = smul.u32 2, %s22
        %s251 = smul.u32 4, %s24
        %p252 = scmp.lt.s32.totalorder %s250, 1
        %s253 = scalar_select %p252, %s250, 1
        %p254 = scmp.lt.s32.totalorder %s251, 3
        %s255 = scalar_select %p254, %s251, 3
        %s256 = smul.addr %s253, 4
        %s257 = sadd.s32 %s255, %s256
        %s258 = smul.addr %s257, 4
        %s259 = scalar_lea.vmem %s0, %s258
        %s260 = smul.u32 2, %s22
        %s261 = smul.u32 4, %s24
        %s262 = smul.u32 16, %s24
        %p263 = scmp.lt.s32.totalorder %s23, 1
        %s264 = scalar_select %p263, %s23, 1
        %s265 = scalar_lea.vmem %s2, %s264
        %s266 = smul.u32 2, %s22
        %p268 = scmp.eq.s32.totalorder %s24, 0
        // Predicated region
        $region37: #{_int8_linear_prepared.1} parent=31 // pred_check
          %p269 = pneg %p268
        $region38: #{_int8_linear_prepared.1} parent=31 // pred_check_branch
          %271 = sbr.rel (%p269) target = $region40
        $region39: #{_int8_linear_prepared.1} parent=31 // pred_region
          %272 = vst [vmem:[#allocation2] sm:$0xff] 0.0
          %273 = vst [vmem:[#allocation2 + $0x8] sm:$0xff] 0.0
        $region40: #{_int8_linear_prepared.1} parent=31 // pred_fallthru
          _
        %v274 = vld [vmem:[#allocation2] sm:$0xff]
        %v275 = vld [vmem:[#allocation2 + $0x8] sm:$0xff]
        %v276 = vld [vmem:[%s215] sm:$0xff]
        %v277 = vld [vmem:[%s215 + $0x8] sm:$0xff]
        %v278 = vld [vmem:[%s215 + $0x10] sm:$0xff]
        %v279 = vld [vmem:[%s215 + $0x18] sm:$0xff]
        %v280 = vld [vmem:[%s215 + $0x20] sm:$0xff]
        %v281 = vld [vmem:[%s215 + $0x28] sm:$0xff]
        %v282 = vld [vmem:[%s215 + $0x30] sm:$0xff]
        %v283 = vld [vmem:[%s215 + $0x38] sm:$0xff]
        %v284 = vld [vmem:[%s215 + $0x40] sm:$0xff]
        %v285 = vld [vmem:[%s215 + $0x48] sm:$0xff]
        %v286 = vld [vmem:[%s215 + $0x50] sm:$0xff]
        %v287 = vld [vmem:[%s215 + $0x58] sm:$0xff]
        %v288 = vld [vmem:[%s215 + $0x60] sm:$0xff]
        %v289 = vld [vmem:[%s215 + $0x68] sm:$0xff]
        %v290 = vld [vmem:[%s215 + $0x70] sm:$0xff]
        %v291 = vld [vmem:[%s215 + $0x78] sm:$0xff]
        %v292 = vunpack.c.l.s8.bf16 %v276
        %v293 = vunpack.c.h.s8.bf16 %v276
        %v294 = vunpack.c.l.s8.bf16 %v277
        %v295 = vunpack.c.h.s8.bf16 %v277
        %v296 = vunpack.c.l.s8.bf16 %v278
        %v297 = vunpack.c.h.s8.bf16 %v278
        %v298 = vunpack.c.l.s8.bf16 %v279
        %v299 = vunpack.c.h.s8.bf16 %v279
        %v300 = vunpack.c.l.s8.bf16 %v280
        %v301 = vunpack.c.h.s8.bf16 %v280
        %v302 = vunpack.c.l.s8.bf16 %v281
        %v303 = vunpack.c.h.s8.bf16 %v281
        %v304 = vunpack.c.l.s8.bf16 %v282
        %v305 = vunpack.c.h.s8.bf16 %v282
        %v306 = vunpack.c.l.s8.bf16 %v283
        %v307 = vunpack.c.h.s8.bf16 %v283
        %v308 = vunpack.c.l.s8.bf16 %v284
        %v309 = vunpack.c.h.s8.bf16 %v284
        %v310 = vunpack.c.l.s8.bf16 %v285
        %v311 = vunpack.c.h.s8.bf16 %v285
        %v312 = vunpack.c.l.s8.bf16 %v286
        %v313 = vunpack.c.h.s8.bf16 %v286
        %v314 = vunpack.c.l.s8.bf16 %v287
        %v315 = vunpack.c.h.s8.bf16 %v287
        %v316 = vunpack.c.l.s8.bf16 %v288
        %v317 = vunpack.c.h.s8.bf16 %v288
        %v318 = vunpack.c.l.s8.bf16 %v289
        %v319 = vunpack.c.h.s8.bf16 %v289
        %v320 = vunpack.c.l.s8.bf16 %v290
        %v321 = vunpack.c.h.s8.bf16 %v290
        %v322 = vunpack.c.l.s8.bf16 %v291
        %v323 = vunpack.c.h.s8.bf16 %v291
        %v324 = vld [vmem:[%s259] sm:$0xff]
        %v325 = vld [vmem:[%s259 + $0x8] sm:$0xff]
        %v326 = vld [vmem:[%s259 + $0x10] sm:$0xff]
        %v327 = vld [vmem:[%s259 + $0x18] sm:$0xff]
        %v332 = vunpack.c.l.b16 %v324
        %v333 = vunpack.c.h.b16 %v324
        %v334 = vunpack.c.l.b16 %v325
        %v335 = vunpack.c.h.b16 %v325
        %v336 = vunpack.c.l.b16 %v326
        %v337 = vunpack.c.h.b16 %v326
        %v338 = vunpack.c.l.b16 %v327
        %v339 = vunpack.c.h.b16 %v327
        %v340 = vpack.c.b16 %v336, %v332
        %v341 = vpack.c.b16 %v337, %v333
        %v342 = vpack.c.b16 %v338, %v334
        %v343 = vpack.c.b16 %v339, %v335
        %348 = vmatprep.subr.bf16.mxu0 0
        %349 = vmatpush1.bf16.msra.mxu0 %v292
        %350 = vmatprep.subr.bf16.mxu0 0
        %351 = vmatpush1.bf16.msra.mxu0 %v293
        %352 = vmatprep.subr.bf16.mxu0 0
        %353 = vmatpush1.bf16.msra.mxu0 %v294
        %354 = vmatprep.subr.bf16.mxu0 0
        %355 = vmatpush1.bf16.msra.mxu0 %v295
        %356 = vmatprep.subr.bf16.mxu0 0
        %357 = vmatpush1.bf16.msra.mxu0 %v296
        %358 = vmatprep.subr.bf16.mxu0 0
        %359 = vmatpush1.bf16.msra.mxu0 %v297
        %360 = vmatprep.subr.bf16.mxu0 0
        %361 = vmatpush1.bf16.msra.mxu0 %v298
        %362 = vmatprep.subr.bf16.mxu0 0
        %363 = vmatpush1.bf16.msra.mxu0 %v299
        %364 = vmatprep.subr.bf16.mxu0 0
        %365 = vmatpush1.bf16.msra.mxu0 %v300
        %366 = vmatprep.subr.bf16.mxu0 0
        %367 = vmatpush1.bf16.msra.mxu0 %v301
        %368 = vmatprep.subr.bf16.mxu0 0
        %369 = vmatpush1.bf16.msra.mxu0 %v302
        %370 = vmatprep.subr.bf16.mxu0 0
        %371 = vmatpush1.bf16.msra.mxu0 %v303
        %372 = vmatprep.subr.bf16.mxu0 0
        %373 = vmatpush1.bf16.msra.mxu0 %v304
        %374 = vmatprep.subr.bf16.mxu0 0
        %375 = vmatpush1.bf16.msra.mxu0 %v305
        %376 = vmatprep.subr.bf16.mxu0 0
        %377 = vmatpush1.bf16.msra.mxu0 %v306
        %378 = vmatprep.subr.bf16.mxu0 0
        %379 = vmatpush1.bf16.msra.mxu0 %v307
        %380 = vmatprep.mubr.bf16.mxu0 %v341
        %381 = vmatmul.mubr.bf16.gmra.mrb[0].mxu0 %v340
        %v382 = vpop.f32.mrb[0].mxu0
        %v383 = vadd.f32 0.0, %v382
        %v384 = vpop.f32.mrb[0].mxu0
        %v385 = vpop.f32.mrb[0].mxu0
        %v386 = vadd.f32 0.0, %v385
        %v387 = vpop.f32.mrb[0].mxu0
        %388 = vdwg.mxu0
        %389 = vmatprep.subr.bf16.mxu0 0
        %390 = vmatpush1.bf16.msra.mxu0 %v308
        %391 = vmatprep.subr.bf16.mxu0 0
        %392 = vmatpush1.bf16.msra.mxu0 %v309
        %393 = vmatprep.subr.bf16.mxu0 0
        %394 = vmatpush1.bf16.msra.mxu0 %v310
        %395 = vmatprep.subr.bf16.mxu0 0
        %396 = vmatpush1.bf16.msra.mxu0 %v311
        %397 = vmatprep.subr.bf16.mxu0 0
        %398 = vmatpush1.bf16.msra.mxu0 %v312
        %399 = vmatprep.subr.bf16.mxu0 0
        %400 = vmatpush1.bf16.msra.mxu0 %v313
        %401 = vmatprep.subr.bf16.mxu0 0
        %402 = vmatpush1.bf16.msra.mxu0 %v314
        %403 = vmatprep.subr.bf16.mxu0 0
        %404 = vmatpush1.bf16.msra.mxu0 %v315
        %405 = vmatprep.subr.bf16.mxu0 0
        %406 = vmatpush1.bf16.msra.mxu0 %v316
        %407 = vmatprep.subr.bf16.mxu0 0
        %408 = vmatpush1.bf16.msra.mxu0 %v317
        %409 = vmatprep.subr.bf16.mxu0 0
        %410 = vmatpush1.bf16.msra.mxu0 %v318
        %411 = vmatprep.subr.bf16.mxu0 0
        %412 = vmatpush1.bf16.msra.mxu0 %v319
        %413 = vmatprep.subr.bf16.mxu0 0
        %414 = vmatpush1.bf16.msra.mxu0 %v320
        %415 = vmatprep.subr.bf16.mxu0 0
        %416 = vmatpush1.bf16.msra.mxu0 %v321
        %417 = vmatprep.subr.bf16.mxu0 0
        %418 = vmatpush1.bf16.msra.mxu0 %v322
        %419 = vmatprep.subr.bf16.mxu0 0
        %420 = vmatpush1.bf16.msra.mxu0 %v323
        %421 = vmatprep.mubr.bf16.mxu0 %v343
        %422 = vmatmul.mubr.bf16.gmra.mrb[0].mxu0 %v342
        %v423 = vpop.f32.mrb[0].mxu0
        %v424 = vadd.f32 %v383, %v423
        %v425 = vpop.f32.mrb[0].mxu0
        %v426 = vpop.f32.mrb[0].mxu0
        %v427 = vadd.f32 %v386, %v426
        %v428 = vpop.f32.mrb[0].mxu0
        %429 = vdwg.mxu0
        %v430 = vadd.f32 %v274, %v424
        %v431 = vadd.f32 %v275, %v427
        %432 = vst [vmem:[#allocation2] sm:$0xff] %v430
        %433 = vst [vmem:[#allocation2 + $0x8] sm:$0xff] %v431
        // Predicated region
        $region41: #{_int8_linear_prepared.1} parent=31 // pred_check
          %p434 = pneg %p268
        $region42: #{_int8_linear_prepared.1} parent=31 // pred_check_branch
          %436 = sbr.rel (%p434) target = $region44
        $region43: #{_int8_linear_prepared.1} parent=31 // pred_region
          %v437 = vld [vmem:[%s265] sm:$0x1]
          %v439 = vlaneseq
          %v440 = vshrl.u32 %v439, 7
          %v441 = vsub.s32 0, %v440
          %v442 = vrot.slane %v437, %v441
          %v444 = vmul.f32 %v430, %v442
          %v445 = vmul.f32 %v431, %v442
          %v446 = vpack.c.bf16 %v445, %v444
          %v448 = vunpack.c.l.b16 %v446
          %v449 = vunpack.c.h.b16 %v446
          %v450 = vpack.c.b16 %v448, %v448
          %v451 = vpack.c.b16 %v449, %v449
          %454 = vst [vmem:[%s249] sm:$0xf] %v450
          %455 = vst [vmem:[%s249 + $0x4] sm:$0xf] %v451
        $region44: #{_int8_linear_prepared.1} parent=31 // pred_fallthru
          _
        %s456 = sand.u32 %s128, 1
        %s457 = sand.u32 %s128, 1
        %s458 = smul.addr %s457, 8
        %s459 = scalar_lea.vmem [#allocation5], %s458
        // Predicated region
        $region45: #{_int8_linear_prepared.1} parent=31 // pred_check
          %p460 = pneg %p138
        $region46: #{_int8_linear_prepared.1} parent=31 // pred_check_branch
          %462 = sbr.rel (%p460) target = $region48
        $region47: #{_int8_linear_prepared.1} parent=31 // pred_region
          %s463 = smul.u32 2, %s22
          %s464 = smul.addr %s463, 2
          %s465 = sadd.s32 %s23, %s464
          %s466 = smul.addr %s465, 4
          %s467 = scalar_lea.vmem %s3, %s466
          // Predicated region
          $region49: #{_int8_linear_prepared.1} parent=47 // pred_check
            _
          $region50: #{_int8_linear_prepared.1} parent=47 // pred_check_branch
            %469 = sbr.rel (0) target = $region52
          $region51: #{_int8_linear_prepared.1} parent=47 // pred_region
            // Predicated region
            $region53: #{_int8_linear_prepared.1} parent=51 // pred_check
              _
            $region54: #{_int8_linear_prepared.1} parent=51 // pred_check_branch
              %471 = sbr.rel target = $region56
            $region55: #{_int8_linear_prepared.1} parent=51 // pred_region
              // Predicated region
              $region68: #{_int8_linear_prepared.1} parent=55 // pred_check
                _
              $region69: #{_int8_linear_prepared.1} parent=55 // pred_check_branch
                %488 = sbr.rel (0) target = $region71
              $region70: #{_int8_linear_prepared.1} parent=55 // pred_region
                loop: start=0, step=1, limit=1
                $region72: #{_int8_linear_prepared.1} parent=70 // loop_pre_header
                  _
                $region73: #{_int8_linear_prepared.1} parent=70 // loop_header
                  %s490 = sphi 0, %s494
                  %p491 = scmp.ge.s32.totalorder %s490, 1
                  %s495 = sphi %s459, %s459
                  %s496 = sphi %s467, %s467
                $region74: #{_int8_linear_prepared.1} parent=70 // loop_header_branch
                  %493 = sbr.rel (%p491) target = $region78
                $region75: #{_int8_linear_prepared.1} parent=70 // loop_body
                  _
                $region76: #{_int8_linear_prepared.1} parent=70 // loop_footer
                  %s494 = sadd.s32 1, %s490
                $region77: #{_int8_linear_prepared.1} parent=70 // loop_footer_branch
                  %489 = sbr.rel target = $region73
                $region78: #{_int8_linear_prepared.1} parent=70 // loop_exit
                  _
                loop: start=0, step=1, limit=1
                $region79: #{_int8_linear_prepared.1} parent=70 // loop_pre_header
                  _
                $region80: #{_int8_linear_prepared.1} parent=70 // loop_header
                  %s499 = sphi 0, %s503
                  %p500 = scmp.ge.s32.totalorder %s499, 1
                  %s504 = sphi %s459, %s459
                  %s505 = sphi %s467, %s467
                $region81: #{_int8_linear_prepared.1} parent=70 // loop_header_branch
                  %502 = sbr.rel (%p500) target = $region85
                $region82: #{_int8_linear_prepared.1} parent=70 // loop_body
                  %v506 = vld [vmem:[%s504] sm:$0xf]
                  %507 = vst [vmem:[%s505] sm:$0xf] %v506
                  %v508 = vld [vmem:[%s504 + $0x4] sm:$0xf]
                  %509 = vst [vmem:[%s505 + $0x8] sm:$0xf] %v508
                $region83: #{_int8_linear_prepared.1} parent=70 // loop_footer
                  %s503 = sadd.s32 1, %s499
                $region84: #{_int8_linear_prepared.1} parent=70 // loop_footer_branch
                  %498 = sbr.rel target = $region80
                $region85: #{_int8_linear_prepared.1} parent=70 // loop_exit
                  _
              $region71: #{_int8_linear_prepared.1} parent=55 // pred_fallthru
                _
            $region56: #{_int8_linear_prepared.1} parent=51 // pred_fallthru
              _
            // Predicated region
            $region57: #{_int8_linear_prepared.1} parent=51 // pred_check
              _
            $region58: #{_int8_linear_prepared.1} parent=51 // pred_check_branch
              %473 = sbr.rel (0) target = $region60
            $region59: #{_int8_linear_prepared.1} parent=51 // pred_region
              loop: start=0, step=1, limit=1
              $region61: #{_int8_linear_prepared.1} parent=59 // loop_pre_header
                _
              $region62: #{_int8_linear_prepared.1} parent=59 // loop_header
                %s476 = sphi 0, %s480
                %p477 = scmp.ge.s32.totalorder %s476, 1
                %s481 = sphi %s459, %s459
                %s482 = sphi %s467, %s467
              $region63: #{_int8_linear_prepared.1} parent=59 // loop_header_branch
                %479 = sbr.rel (%p477) target = $region67
              $region64: #{_int8_linear_prepared.1} parent=59 // loop_body
                %v483 = vld [vmem:[%s481] sm:$0xf]
                %484 = vst [vmem:[%s482] sm:$0xf] %v483
                %v485 = vld [vmem:[%s481 + $0x4] sm:$0xf]
                %486 = vst [vmem:[%s482 + $0x8] sm:$0xf] %v485
              $region65: #{_int8_linear_prepared.1} parent=59 // loop_footer
                %s480 = sadd.s32 1, %s476
              $region66: #{_int8_linear_prepared.1} parent=59 // loop_footer_branch
                %475 = sbr.rel target = $region62
              $region67: #{_int8_linear_prepared.1} parent=59 // loop_exit
                _
            $region60: #{_int8_linear_prepared.1} parent=51 // pred_fallthru
              _
          $region52: #{_int8_linear_prepared.1} parent=47 // pred_fallthru
            _
          %510 = vnop
        $region48: #{_int8_linear_prepared.1} parent=31 // pred_fallthru
          _
      $region32: #{_int8_linear_prepared.1} parent=5 // pred_fallthru
        _
      %p511 = scmp.le.s32.totalorder 2, %s12
      // Predicated region
      $region86: #{_int8_linear_prepared.1} parent=5 // pred_check
        %p512 = pneg %p511
      $region87: #{_int8_linear_prepared.1} parent=5 // pred_check_branch
        %514 = sbr.rel (%p512) target = $region89
      $region88: #{_int8_linear_prepared.1} parent=5 // pred_region
        %s515 = ssub.s32 %s12, 2
        // Predicated region
        $region90: #{_int8_linear_prepared.1} parent=88 // pred_check
          %p516 = pneg %p144
        $region91: #{_int8_linear_prepared.1} parent=88 // pred_check_branch
          %518 = sbr.rel (%p516) target = $region93
        $region92: #{_int8_linear_prepared.1} parent=88 // pred_region
          %s519 = sand.u32 %s129, 1
          %s520 = sand.u32 %s129, 1
          %s521 = smul.addr %s520, 8
          %s522 = scalar_lea.vmem [#allocation5], %s521
        $region93: #{_int8_linear_prepared.1} parent=88 // pred_fallthru
          _
      $region89: #{_int8_linear_prepared.1} parent=5 // pred_fallthru
        _
    $region6: #{_int8_linear_prepared.1} parent=1 // loop_footer
      %s16 = sadd.s32 1, %s12
    $region7: #{_int8_linear_prepared.1} parent=1 // loop_footer_branch
      %11 = sbr.rel target = $region3
    $region8: #{_int8_linear_prepared.1} parent=1 // loop_exit
      _
    %523 = vsyncpa [#allocation4], 1
    %s524 = scalar_lea.sflag [#allocation4], 1
    %525 = vsyncpa %s524, 1

</llo_original>
